<compile_context>
chip_gen: v5e
topology: v5e:2x2
jax: 0.10.0
libtpu: 0.0.40
codegen_flags: <defaults>
</compile_context>

<pallas_src>
import math

import jax
import jax.numpy as jnp
from jax import lax
from jax.experimental import pallas as pl
from jax.experimental.pallas import tpu as pltpu


def _round_up(x, m):
    return (x + m - 1) // m * m


def _vmem_limit_bytes(L, Bb, Hp, Vp):
    """Explicit scoped-VMEM budget for one batch block (+ headroom)."""
    f32, bf16 = 4, 2
    need = 0
    need += 2 * L * Bb * Hp * f32        # xw input (double-buffered)
    need += 2 * Hp * Hp * bf16           # W_hh
    need += 2 * Hp * Vp * bf16           # W_out
    need += 2 * 8 * Vp * f32             # b_out (sublane-padded)
    need += 2 * Bb * Hp * f32            # h0
    need += 2 * Bb * L * Vp * f32        # logits slab output
    need += 2 * Bb * Hp * f32            # final hidden output
    need += L * Bb * Hp * bf16           # hs scratch (single-buffered)
    need += 4 << 20                      # compiler temporaries headroom
    return min(max(need, 16 << 20), 64 << 20)


def _char_rnn_kernel(xw_ref, whh_ref, wout_ref, bout_ref, h0_ref,
                     logits_ref, hfinal_ref, hs_ref):
    """One batch block of the CharRNN forward.

    xw_ref     : (L, Bb, Hp)  f32   gathered  emb[token] @ W_ih + b_h
    whh_ref    : (Hp, Hp)     bf16
    wout_ref   : (Hp, Vp)     bf16  (transposed nn.Linear weight)
    bout_ref   : (1, Vp)      f32
    h0_ref     : (Bb, Hp)     f32
    logits_ref : (Bb, L*Vp)   f32   batch-major, lane-dense logits slab
    hfinal_ref : (Bb, Hp)     f32
    hs_ref     : (L, Bb, Hp)  bf16  scratch: per-step hidden states (MXU LHS)
    """
    L, Bb, Hp = xw_ref.shape
    Vp = wout_ref.shape[1]
    C = math.gcd(L, 8)            # time-chunk size == capped unroll factor
    n_chunks = L // C

    # Loop-invariant recurrent weight (MXU RHS), loaded once.
    w_hh = whh_ref[...]

    def run_chunk(c, h):
        """Serial recurrence for time steps [c*C, (c+1)*C); h carried in vregs."""
        def step(s, h_prev):
            t = c * C + s
            h_t = jnp.tanh(
                xw_ref[t]
                + jnp.dot(h_prev.astype(jnp.bfloat16), w_hh,
                          preferred_element_type=jnp.float32))
            hs_ref[t] = h_t.astype(jnp.bfloat16)
            return h_t
        return lax.fori_loop(0, C, step, h, unroll=True)

    def project_chunk(c):
        """Output projection + lane-dense scatter of logits for time chunk c."""
        base = c * C
        hs_chunk = hs_ref[pl.ds(base, C)]                        # (C, Bb, Hp) bf16
        proj = jnp.dot(hs_chunk.reshape(C * Bb, Hp), wout_ref[...],
                       preferred_element_type=jnp.float32) + bout_ref[...]
        for s in range(C):                                       # static; bounded live range
            col = (base + s) * Vp
            if not isinstance(col, int):
                col = pl.multiple_of(col, Vp)                    # aligned 128-lane store
            logits_ref[:, pl.ds(col, Vp)] = proj[s * Bb:(s + 1) * Bb, :]

    # Prologue: recurrence for chunk 0 (nothing to project yet).
    h = run_chunk(0, h0_ref[...])

    # Steady state: project chunk c-1 (data ready, independent) while stepping
    # chunk c, so the logits matmul fills slots idle during the serial
    # recurrence and vreg pressure stays bounded per chunk.
    def chunk_body(c, h_carry):
        project_chunk(c - 1)
        return run_chunk(c, h_carry)

    h_last = lax.fori_loop(1, n_chunks, chunk_body, h)
    hfinal_ref[...] = h_last           # written exactly once, after the loop
    project_chunk(n_chunks - 1)        # epilogue: last chunk's logits


def prepare_params(params):
    """One-time weight prep (pad / cast / transpose), hoisted out of the call path."""
    emb = params["embedding"].astype(jnp.float32)       # [V, E]
    w_ih = params["W_ih"].astype(jnp.float32)           # [E, H]
    w_hh = params["W_hh"].astype(jnp.float32)           # [H, H]
    b_h = params["b_h"].astype(jnp.float32)             # [H]
    w_out = params["W_out"].astype(jnp.float32)         # [V, H] (nn.Linear layout)
    b_out = params["b_out"].astype(jnp.float32)         # [V]

    V, _E = emb.shape
    H = w_hh.shape[0]
    Hp = _round_up(H, 128)
    Vp = _round_up(V, 128)

    # Fused embedding + input projection: row v of the table is emb[v]@W_ih + b_h,
    # so the per-token input projection becomes a plain row gather.
    xw_table = emb @ w_ih + b_h                          # [V, H] f32

    prepared = {
        "xw_table": jnp.pad(xw_table, ((0, 0), (0, Hp - H))),                      # [V, Hp] f32
        "W_hh": jnp.pad(w_hh, ((0, Hp - H), (0, Hp - H))).astype(jnp.bfloat16),    # [Hp, Hp]
        "W_out": jnp.pad(w_out.T, ((0, Hp - H), (0, Vp - V))).astype(jnp.bfloat16),# [Hp, Vp]
        "b_out": jnp.pad(b_out, (0, Vp - V)).reshape(1, Vp),                       # [1, Vp] f32
    }
    dims = (H, V)                                        # static python ints
    return prepared, dims


def char_rnn_forward(x_tokens, prepared, hidden=None, *, dims):
    """x_tokens: int32 [B, L].  Returns (logits [B, L, V], final_hidden [B, H])."""
    H, V = dims
    xw_table = prepared["xw_table"]
    whh_p = prepared["W_hh"]
    wout_p = prepared["W_out"]
    bout_p = prepared["b_out"]
    Hp = whh_p.shape[0]
    Vp = wout_p.shape[1]

    B, L = x_tokens.shape
    Bp = _round_up(B, 8)
    if Bp > 256:
        Bb = 256                       # batch block: MXU height on v6e/v7x
        Bp = _round_up(Bp, Bb)
    else:
        Bb = Bp

    # TODO(synk): the per-token row gather is data-dependent; it is done with
    # jnp.take in the wrapper rather than inside the Pallas kernel.
    tok_p = jnp.pad(x_tokens, ((0, Bp - B), (0, 0)))
    # Gather directly in time-major order: xw[t, b] = emb[tok[b, t]] @ W_ih + b_h
    # (the [B,L]->[L,B] transpose is folded into the tiny integer token transpose).
    xw = jnp.take(xw_table, tok_p.T, axis=0)             # [L, Bp, Hp] f32

    if hidden is None:
        h0 = jnp.zeros((Bp, Hp), jnp.float32)
    else:
        h0 = jnp.pad(hidden.astype(jnp.float32), ((0, Bp - B), (0, Hp - H)))

    grid = (Bp // Bb,)                                    # batch blocks (megacore-parallel)

    logits_slab, h_final_p = pl.pallas_call(
        _char_rnn_kernel,
        out_shape=(
            jax.ShapeDtypeStruct((Bp, L * Vp), jnp.float32),
            jax.ShapeDtypeStruct((Bp, Hp), jnp.float32),
        ),
        grid=grid,
        in_specs=[
            pl.BlockSpec((L, Bb, Hp), lambda b: (0, b, 0)),   # xw
            pl.BlockSpec((Hp, Hp), lambda b: (0, 0)),         # W_hh
            pl.BlockSpec((Hp, Vp), lambda b: (0, 0)),         # W_out
            pl.BlockSpec((1, Vp), lambda b: (0, 0)),          # b_out
            pl.BlockSpec((Bb, Hp), lambda b: (b, 0)),         # h0
        ],
        out_specs=(
            pl.BlockSpec((Bb, L * Vp), lambda b: (b, 0)),     # logits slab
            pl.BlockSpec((Bb, Hp), lambda b: (b, 0)),         # final hidden
        ),
        scratch_shapes=[
            pltpu.VMEM((L, Bb, Hp), jnp.bfloat16),            # hs: per-step hidden states
        ],
        compiler_params=pltpu.CompilerParams(
            dimension_semantics=("parallel",),
            vmem_limit_bytes=_vmem_limit_bytes(L, Bb, Hp, Vp),
        ),
    )(xw, whh_p, wout_p, bout_p, h0)

    logits = logits_slab.reshape(Bp, L, Vp)[:B, :, :V]    # free reshape + slice
    final_hidden = h_final_p[:B, :H]
    return logits, final_hidden


def init_params(key, vocab_size, hidden_size, embedding_dim):
    k_emb, k_ih, k_hh, k_out_w, k_out_b = jax.random.split(key, 5)
    # nn.Embedding ~ N(0,1); W_ih/W_hh ~ N(0,1)*0.01; b_h zeros;
    # nn.Linear: uniform(-1/sqrt(H), 1/sqrt(H)) for weight and bias.
    bound = 1.0 / jnp.sqrt(hidden_size)
    return {
        "embedding": jax.random.normal(k_emb, (vocab_size, embedding_dim), jnp.float32),
        "W_ih": jax.random.normal(k_ih, (embedding_dim, hidden_size), jnp.float32) * 0.01,
        "W_hh": jax.random.normal(k_hh, (hidden_size, hidden_size), jnp.float32) * 0.01,
        "b_h": jnp.zeros((hidden_size,), jnp.float32),
        "W_out": jax.random.uniform(k_out_w, (vocab_size, hidden_size), jnp.float32,
                                    -bound, bound),
        "b_out": jax.random.uniform(k_out_b, (vocab_size,), jnp.float32, -bound, bound),
    }


def _reference_forward(x_tokens, params, hidden=None):
    """Pure-JAX (f32) reference mirroring the PyTorch forward."""
    emb = params["embedding"]
    x_embed = jnp.take(emb, x_tokens, axis=0)             # [B, L, E]
    B, L, _ = x_embed.shape
    H = params["W_hh"].shape[0]
    h = jnp.zeros((B, H), jnp.float32) if hidden is None else hidden
    outs = []
    for t in range(L):
        x_t = x_embed[:, t, :]
        h = jnp.tanh(x_t @ params["W_ih"] + h @ params["W_hh"] + params["b_h"])
        outs.append(h)
    out = jnp.stack(outs, axis=1)                          # [B, L, H]
    logits = out @ params["W_out"].T + params["b_out"]     # [B, L, V]
    return logits, h


if __name__ == "__main__":
    key = jax.random.PRNGKey(0)
    k_param, k_tok = jax.random.split(key)

    batch = 2
    seq_len = 8
    hidden_size = 32
    embedding_dim = 64
    vocab_size = 32          # output_size == len(vocab)

    params = init_params(k_param, vocab_size, hidden_size, embedding_dim)
    x_tokens = jax.random.randint(k_tok, (batch, seq_len), 0, vocab_size, jnp.int32)

    # One-time weight prep, reused across calls (hoisted out of the forward).
    prepared, dims = prepare_params(params)

    fwd = jax.jit(char_rnn_forward, static_argnames=("dims",))
    logits, final_hidden = fwd(x_tokens, prepared, dims=dims)
    logits = jax.block_until_ready(logits)
    final_hidden = jax.block_until_ready(final_hidden)

    # Sanity check against the f32 reference (kernel uses bf16 MXU operands
    # with f32 accumulation, so allow a bf16-sized tolerance).
    ref_logits, ref_hidden = _reference_forward(x_tokens, params, hidden=None)
    assert logits.shape == (batch, seq_len, vocab_size)
    assert final_hidden.shape == (batch, hidden_size)
    assert jnp.allclose(logits, ref_logits, atol=2e-2, rtol=2e-2), (
        "max logits err: %e" % float(jnp.max(jnp.abs(logits - ref_logits))))
    assert jnp.allclose(final_hidden, ref_hidden, atol=2e-2, rtol=2e-2), (
        "max hidden err: %e" % float(jnp.max(jnp.abs(final_hidden - ref_hidden))))

    print("KERNEL_OK")
</pallas_src>

<mosaic_0001>
module attributes {stable_mosaic.version = 11 : i64} {
  func.func @_char_rnn_kernel(%arg0: i32, %arg1: memref<8x8x128xf32, #tpu.memory_space<vmem>>, %arg2: memref<128x128xbf16, #tpu.memory_space<vmem>>, %arg3: memref<128x128xbf16, #tpu.memory_space<vmem>>, %arg4: memref<1x128xf32, #tpu.memory_space<vmem>>, %arg5: memref<8x128xf32, #tpu.memory_space<vmem>>, %arg6: memref<8x1024xf32, #tpu.memory_space<vmem>>, %arg7: memref<8x128xf32, #tpu.memory_space<vmem>>, %arg8: memref<8x8x128xbf16, #tpu.memory_space<vmem>>) attributes {dimension_semantics = [#tpu.dimension_semantics<parallel>], iteration_bounds = array<i64: 1>, scalar_prefetch = 0 : i64, scratch_operands = 1 : i64, tpu.core_type = #tpu.core_type<tc>, window_params = [{transform_indices = @transform_0, window_bounds = array<i64: 8, 8, 128>}, {pipeline_mode = #tpu.pipeline_mode<synchronous>, transform_indices = @transform_1, window_bounds = array<i64: 128, 128>}, {pipeline_mode = #tpu.pipeline_mode<synchronous>, transform_indices = @transform_2, window_bounds = array<i64: 128, 128>}, {pipeline_mode = #tpu.pipeline_mode<synchronous>, transform_indices = @transform_3, window_bounds = array<i64: 1, 128>}, {transform_indices = @transform_4, window_bounds = array<i64: 8, 128>}, {transform_indices = @transform_5, window_bounds = array<i64: 8, 1024>}, {transform_indices = @transform_6, window_bounds = array<i64: 8, 128>}]} {
    %c0 = arith.constant 0 : index
    %c0_0 = arith.constant 0 : index
    %0 = vector.load %arg2[%c0, %c0_0] : memref<128x128xbf16, #tpu.memory_space<vmem>>, vector<128x128xbf16>
    %c0_1 = arith.constant 0 : index
    %c0_2 = arith.constant 0 : index
    %1 = vector.load %arg5[%c0_1, %c0_2] : memref<8x128xf32, #tpu.memory_space<vmem>>, vector<8x128xf32>
    %c0_i32 = arith.constant 0 : i32
    %c0_i32_3 = arith.constant 0 : i32
    %2 = arith.addi %c0_i32_3, %c0_i32 : i32
    %3 = arith.index_cast %2 : i32 to index
    %c0_4 = arith.constant 0 : index
    %c0_5 = arith.constant 0 : index
    %4 = vector.load %arg1[%3, %c0_4, %c0_5] : memref<8x8x128xf32, #tpu.memory_space<vmem>>, vector<1x8x128xf32>
    %5 = vector.shape_cast %4 : vector<1x8x128xf32> to vector<8x128xf32>
    %6 = arith.truncf %1 : vector<8x128xf32> to vector<8x128xbf16>
    %cst = arith.constant dense<0.000000e+00> : vector<8x128xf32>
    %7 = tpu.matmul %6, %0, %cst {dimension_numbers = #tpu.dot_dimension_numbers<[1], [0], [0], [1], [0, 0, 1, 1], [], []>} : vector<8x128xbf16>, vector<128x128xbf16>, vector<8x128xf32> -> vector<8x128xf32>
    %8 = arith.addf %5, %7 : vector<8x128xf32>
    %9 = math.tanh %8 : vector<8x128xf32>
    %10 = arith.truncf %9 : vector<8x128xf32> to vector<8x128xbf16>
    %11 = arith.index_cast %2 : i32 to index
    %c0_6 = arith.constant 0 : index
    %c0_7 = arith.constant 0 : index
    %12 = vector.load %arg8[%11, %c0_6, %c0_7] : memref<8x8x128xbf16, #tpu.memory_space<vmem>>, vector<1x8x128xbf16>
    %13 = vector.shape_cast %12 : vector<1x8x128xbf16> to vector<8x128xbf16>
    %14 = vector.shape_cast %10 : vector<8x128xbf16> to vector<1x8x128xbf16>
    tpu.vector_store %arg8[%11, %c0_6, %c0_7], %14 {strides = array<i32>} : memref<8x8x128xbf16, #tpu.memory_space<vmem>>, vector<1x8x128xbf16>,
    %c1_i32 = arith.constant 1 : i32
    %c0_i32_8 = arith.constant 0 : i32
    %15 = arith.addi %c0_i32_8, %c1_i32 : i32
    %16 = arith.index_cast %15 : i32 to index
    %c0_9 = arith.constant 0 : index
    %c0_10 = arith.constant 0 : index
    %17 = vector.load %arg1[%16, %c0_9, %c0_10] : memref<8x8x128xf32, #tpu.memory_space<vmem>>, vector<1x8x128xf32>
    %18 = vector.shape_cast %17 : vector<1x8x128xf32> to vector<8x128xf32>
    %19 = arith.truncf %9 : vector<8x128xf32> to vector<8x128xbf16>
    %cst_11 = arith.constant dense<0.000000e+00> : vector<8x128xf32>
    %20 = tpu.matmul %19, %0, %cst_11 {dimension_numbers = #tpu.dot_dimension_numbers<[1], [0], [0], [1], [0, 0, 1, 1], [], []>} : vector<8x128xbf16>, vector<128x128xbf16>, vector<8x128xf32> -> vector<8x128xf32>
    %21 = arith.addf %18, %20 : vector<8x128xf32>
    %22 = math.tanh %21 : vector<8x128xf32>
    %23 = arith.truncf %22 : vector<8x128xf32> to vector<8x128xbf16>
    %24 = arith.index_cast %15 : i32 to index
    %c0_12 = arith.constant 0 : index
    %c0_13 = arith.constant 0 : index
    %25 = vector.load %arg8[%24, %c0_12, %c0_13] : memref<8x8x128xbf16, #tpu.memory_space<vmem>>, vector<1x8x128xbf16>
    %26 = vector.shape_cast %25 : vector<1x8x128xbf16> to vector<8x128xbf16>
    %27 = vector.shape_cast %23 : vector<8x128xbf16> to vector<1x8x128xbf16>
    tpu.vector_store %arg8[%24, %c0_12, %c0_13], %27 {strides = array<i32>} : memref<8x8x128xbf16, #tpu.memory_space<vmem>>, vector<1x8x128xbf16>,
    %c2_i32 = arith.constant 2 : i32
    %c0_i32_14 = arith.constant 0 : i32
    %28 = arith.addi %c0_i32_14, %c2_i32 : i32
    %29 = arith.index_cast %28 : i32 to index
    %c0_15 = arith.constant 0 : index
    %c0_16 = arith.constant 0 : index
    %30 = vector.load %arg1[%29, %c0_15, %c0_16] : memref<8x8x128xf32, #tpu.memory_space<vmem>>, vector<1x8x128xf32>
    %31 = vector.shape_cast %30 : vector<1x8x128xf32> to vector<8x128xf32>
    %32 = arith.truncf %22 : vector<8x128xf32> to vector<8x128xbf16>
    %cst_17 = arith.constant dense<0.000000e+00> : vector<8x128xf32>
    %33 = tpu.matmul %32, %0, %cst_17 {dimension_numbers = #tpu.dot_dimension_numbers<[1], [0], [0], [1], [0, 0, 1, 1], [], []>} : vector<8x128xbf16>, vector<128x128xbf16>, vector<8x128xf32> -> vector<8x128xf32>
    %34 = arith.addf %31, %33 : vector<8x128xf32>
    %35 = math.tanh %34 : vector<8x128xf32>
    %36 = arith.truncf %35 : vector<8x128xf32> to vector<8x128xbf16>
    %37 = arith.index_cast %28 : i32 to index
    %c0_18 = arith.constant 0 : index
    %c0_19 = arith.constant 0 : index
    %38 = vector.load %arg8[%37, %c0_18, %c0_19] : memref<8x8x128xbf16, #tpu.memory_space<vmem>>, vector<1x8x128xbf16>
    %39 = vector.shape_cast %38 : vector<1x8x128xbf16> to vector<8x128xbf16>
    %40 = vector.shape_cast %36 : vector<8x128xbf16> to vector<1x8x128xbf16>
    tpu.vector_store %arg8[%37, %c0_18, %c0_19], %40 {strides = array<i32>} : memref<8x8x128xbf16, #tpu.memory_space<vmem>>, vector<1x8x128xbf16>,
    %c3_i32 = arith.constant 3 : i32
    %c0_i32_20 = arith.constant 0 : i32
    %41 = arith.addi %c0_i32_20, %c3_i32 : i32
    %42 = arith.index_cast %41 : i32 to index
    %c0_21 = arith.constant 0 : index
    %c0_22 = arith.constant 0 : index
    %43 = vector.load %arg1[%42, %c0_21, %c0_22] : memref<8x8x128xf32, #tpu.memory_space<vmem>>, vector<1x8x128xf32>
    %44 = vector.shape_cast %43 : vector<1x8x128xf32> to vector<8x128xf32>
    %45 = arith.truncf %35 : vector<8x128xf32> to vector<8x128xbf16>
    %cst_23 = arith.constant dense<0.000000e+00> : vector<8x128xf32>
    %46 = tpu.matmul %45, %0, %cst_23 {dimension_numbers = #tpu.dot_dimension_numbers<[1], [0], [0], [1], [0, 0, 1, 1], [], []>} : vector<8x128xbf16>, vector<128x128xbf16>, vector<8x128xf32> -> vector<8x128xf32>
    %47 = arith.addf %44, %46 : vector<8x128xf32>
    %48 = math.tanh %47 : vector<8x128xf32>
    %49 = arith.truncf %48 : vector<8x128xf32> to vector<8x128xbf16>
    %50 = arith.index_cast %41 : i32 to index
    %c0_24 = arith.constant 0 : index
    %c0_25 = arith.constant 0 : index
    %51 = vector.load %arg8[%50, %c0_24, %c0_25] : memref<8x8x128xbf16, #tpu.memory_space<vmem>>, vector<1x8x128xbf16>
    %52 = vector.shape_cast %51 : vector<1x8x128xbf16> to vector<8x128xbf16>
    %53 = vector.shape_cast %49 : vector<8x128xbf16> to vector<1x8x128xbf16>
    tpu.vector_store %arg8[%50, %c0_24, %c0_25], %53 {strides = array<i32>} : memref<8x8x128xbf16, #tpu.memory_space<vmem>>, vector<1x8x128xbf16>,
    %c4_i32 = arith.constant 4 : i32
    %c0_i32_26 = arith.constant 0 : i32
    %54 = arith.addi %c0_i32_26, %c4_i32 : i32
    %55 = arith.index_cast %54 : i32 to index
    %c0_27 = arith.constant 0 : index
    %c0_28 = arith.constant 0 : index
    %56 = vector.load %arg1[%55, %c0_27, %c0_28] : memref<8x8x128xf32, #tpu.memory_space<vmem>>, vector<1x8x128xf32>
    %57 = vector.shape_cast %56 : vector<1x8x128xf32> to vector<8x128xf32>
    %58 = arith.truncf %48 : vector<8x128xf32> to vector<8x128xbf16>
    %cst_29 = arith.constant dense<0.000000e+00> : vector<8x128xf32>
    %59 = tpu.matmul %58, %0, %cst_29 {dimension_numbers = #tpu.dot_dimension_numbers<[1], [0], [0], [1], [0, 0, 1, 1], [], []>} : vector<8x128xbf16>, vector<128x128xbf16>, vector<8x128xf32> -> vector<8x128xf32>
    %60 = arith.addf %57, %59 : vector<8x128xf32>
    %61 = math.tanh %60 : vector<8x128xf32>
    %62 = arith.truncf %61 : vector<8x128xf32> to vector<8x128xbf16>
    %63 = arith.index_cast %54 : i32 to index
    %c0_30 = arith.constant 0 : index
    %c0_31 = arith.constant 0 : index
    %64 = vector.load %arg8[%63, %c0_30, %c0_31] : memref<8x8x128xbf16, #tpu.memory_space<vmem>>, vector<1x8x128xbf16>
    %65 = vector.shape_cast %64 : vector<1x8x128xbf16> to vector<8x128xbf16>
    %66 = vector.shape_cast %62 : vector<8x128xbf16> to vector<1x8x128xbf16>
    tpu.vector_store %arg8[%63, %c0_30, %c0_31], %66 {strides = array<i32>} : memref<8x8x128xbf16, #tpu.memory_space<vmem>>, vector<1x8x128xbf16>,
    %c5_i32 = arith.constant 5 : i32
    %c0_i32_32 = arith.constant 0 : i32
    %67 = arith.addi %c0_i32_32, %c5_i32 : i32
    %68 = arith.index_cast %67 : i32 to index
    %c0_33 = arith.constant 0 : index
    %c0_34 = arith.constant 0 : index
    %69 = vector.load %arg1[%68, %c0_33, %c0_34] : memref<8x8x128xf32, #tpu.memory_space<vmem>>, vector<1x8x128xf32>
    %70 = vector.shape_cast %69 : vector<1x8x128xf32> to vector<8x128xf32>
    %71 = arith.truncf %61 : vector<8x128xf32> to vector<8x128xbf16>
    %cst_35 = arith.constant dense<0.000000e+00> : vector<8x128xf32>
    %72 = tpu.matmul %71, %0, %cst_35 {dimension_numbers = #tpu.dot_dimension_numbers<[1], [0], [0], [1], [0, 0, 1, 1], [], []>} : vector<8x128xbf16>, vector<128x128xbf16>, vector<8x128xf32> -> vector<8x128xf32>
    %73 = arith.addf %70, %72 : vector<8x128xf32>
    %74 = math.tanh %73 : vector<8x128xf32>
    %75 = arith.truncf %74 : vector<8x128xf32> to vector<8x128xbf16>
    %76 = arith.index_cast %67 : i32 to index
    %c0_36 = arith.constant 0 : index
    %c0_37 = arith.constant 0 : index
    %77 = vector.load %arg8[%76, %c0_36, %c0_37] : memref<8x8x128xbf16, #tpu.memory_space<vmem>>, vector<1x8x128xbf16>
    %78 = vector.shape_cast %77 : vector<1x8x128xbf16> to vector<8x128xbf16>
    %79 = vector.shape_cast %75 : vector<8x128xbf16> to vector<1x8x128xbf16>
    tpu.vector_store %arg8[%76, %c0_36, %c0_37], %79 {strides = array<i32>} : memref<8x8x128xbf16, #tpu.memory_space<vmem>>, vector<1x8x128xbf16>,
    %c6_i32 = arith.constant 6 : i32
    %c0_i32_38 = arith.constant 0 : i32
    %80 = arith.addi %c0_i32_38, %c6_i32 : i32
    %81 = arith.index_cast %80 : i32 to index
    %c0_39 = arith.constant 0 : index
    %c0_40 = arith.constant 0 : index
    %82 = vector.load %arg1[%81, %c0_39, %c0_40] : memref<8x8x128xf32, #tpu.memory_space<vmem>>, vector<1x8x128xf32>
    %83 = vector.shape_cast %82 : vector<1x8x128xf32> to vector<8x128xf32>
    %84 = arith.truncf %74 : vector<8x128xf32> to vector<8x128xbf16>
    %cst_41 = arith.constant dense<0.000000e+00> : vector<8x128xf32>
    %85 = tpu.matmul %84, %0, %cst_41 {dimension_numbers = #tpu.dot_dimension_numbers<[1], [0], [0], [1], [0, 0, 1, 1], [], []>} : vector<8x128xbf16>, vector<128x128xbf16>, vector<8x128xf32> -> vector<8x128xf32>
    %86 = arith.addf %83, %85 : vector<8x128xf32>
    %87 = math.tanh %86 : vector<8x128xf32>
    %88 = arith.truncf %87 : vector<8x128xf32> to vector<8x128xbf16>
    %89 = arith.index_cast %80 : i32 to index
    %c0_42 = arith.constant 0 : index
    %c0_43 = arith.constant 0 : index
    %90 = vector.load %arg8[%89, %c0_42, %c0_43] : memref<8x8x128xbf16, #tpu.memory_space<vmem>>, vector<1x8x128xbf16>
    %91 = vector.shape_cast %90 : vector<1x8x128xbf16> to vector<8x128xbf16>
    %92 = vector.shape_cast %88 : vector<8x128xbf16> to vector<1x8x128xbf16>
    tpu.vector_store %arg8[%89, %c0_42, %c0_43], %92 {strides = array<i32>} : memref<8x8x128xbf16, #tpu.memory_space<vmem>>, vector<1x8x128xbf16>,
    %c7_i32 = arith.constant 7 : i32
    %c0_i32_44 = arith.constant 0 : i32
    %93 = arith.addi %c0_i32_44, %c7_i32 : i32
    %94 = arith.index_cast %93 : i32 to index
    %c0_45 = arith.constant 0 : index
    %c0_46 = arith.constant 0 : index
    %95 = vector.load %arg1[%94, %c0_45, %c0_46] : memref<8x8x128xf32, #tpu.memory_space<vmem>>, vector<1x8x128xf32>
    %96 = vector.shape_cast %95 : vector<1x8x128xf32> to vector<8x128xf32>
    %97 = arith.truncf %87 : vector<8x128xf32> to vector<8x128xbf16>
    %cst_47 = arith.constant dense<0.000000e+00> : vector<8x128xf32>
    %98 = tpu.matmul %97, %0, %cst_47 {dimension_numbers = #tpu.dot_dimension_numbers<[1], [0], [0], [1], [0, 0, 1, 1], [], []>} : vector<8x128xbf16>, vector<128x128xbf16>, vector<8x128xf32> -> vector<8x128xf32>
    %99 = arith.addf %96, %98 : vector<8x128xf32>
    %100 = math.tanh %99 : vector<8x128xf32>
    %101 = arith.truncf %100 : vector<8x128xf32> to vector<8x128xbf16>
    %102 = arith.index_cast %93 : i32 to index
    %c0_48 = arith.constant 0 : index
    %c0_49 = arith.constant 0 : index
    %103 = vector.load %arg8[%102, %c0_48, %c0_49] : memref<8x8x128xbf16, #tpu.memory_space<vmem>>, vector<1x8x128xbf16>
    %104 = vector.shape_cast %103 : vector<1x8x128xbf16> to vector<8x128xbf16>
    %105 = vector.shape_cast %101 : vector<8x128xbf16> to vector<1x8x128xbf16>
    tpu.vector_store %arg8[%102, %c0_48, %c0_49], %105 {strides = array<i32>} : memref<8x8x128xbf16, #tpu.memory_space<vmem>>, vector<1x8x128xbf16>,
    %c8_i32 = arith.constant 8 : i32
    %c1_i32_50 = arith.constant 1 : i32
    %c0_i32_51 = arith.constant 0 : i32
    %106 = arith.addi %c1_i32_50, %c0_i32_51 : i32
    %c1_i32_52 = arith.constant 1 : i32
    %107 = scf.for %arg9 = %c1_i32_50 to %106 step %c1_i32_52 iter_args(%arg10 = %100) -> (vector<8x128xf32>)  : i32 {
      %c1_i32_73 = arith.constant 1 : i32
      %132 = arith.subi %arg9, %c1_i32_73 : i32
      %c8_i32_74 = arith.constant 8 : i32
      %133 = arith.muli %132, %c8_i32_74 : i32
      %134 = arith.index_cast %133 : i32 to index
      %c0_75 = arith.constant 0 : index
      %c0_76 = arith.constant 0 : index
      %135 = vector.load %arg8[%134, %c0_75, %c0_76] : memref<8x8x128xbf16, #tpu.memory_space<vmem>>, vector<8x8x128xbf16>
      %136 = vector.shape_cast %135 : vector<8x8x128xbf16> to vector<64x128xbf16>
      %c0_77 = arith.constant 0 : index
      %c0_78 = arith.constant 0 : index
      %137 = vector.load %arg3[%c0_77, %c0_78] : memref<128x128xbf16, #tpu.memory_space<vmem>>, vector<128x128xbf16>
      %cst_79 = arith.constant dense<0.000000e+00> : vector<64x128xf32>
      %138 = tpu.matmul %136, %137, %cst_79 {dimension_numbers = #tpu.dot_dimension_numbers<[1], [0], [0], [1], [0, 0, 1, 1], [], []>} : vector<64x128xbf16>, vector<128x128xbf16>, vector<64x128xf32> -> vector<64x128xf32>
      %c0_80 = arith.constant 0 : index
      %c0_81 = arith.constant 0 : index
      %139 = vector.load %arg4[%c0_80, %c0_81] : memref<1x128xf32, #tpu.memory_space<vmem>>, vector<1x128xf32>
      %140 = vector.broadcast %139 : vector<1x128xf32> to vector<64x128xf32>
      %141 = arith.addf %138, %140 : vector<64x128xf32>
      %c0_i32_82 = arith.constant 0 : i32
      %142 = arith.addi %133, %c0_i32_82 : i32
      %c128_i32 = arith.constant 128 : i32
      %143 = arith.muli %142, %c128_i32 : i32
      %144 = tpu.assume_multiple %143, 128 : i32
      %145 = vector.extract_strided_slice %141 {offsets = [0, 0], sizes = [8, 128], strides = [1, 1]} : vector<64x128xf32> to vector<8x128xf32>
      %c0_83 = arith.constant 0 : index
      %146 = arith.index_cast %144 : i32 to index
      %147 = vector.load %arg6[%c0_83, %146] : memref<8x1024xf32, #tpu.memory_space<vmem>>, vector<8x128xf32>
      tpu.vector_store %arg6[%c0_83, %146], %145 {strides = array<i32>} : memref<8x1024xf32, #tpu.memory_space<vmem>>, vector<8x128xf32>,
      %c1_i32_84 = arith.constant 1 : i32
      %148 = arith.addi %133, %c1_i32_84 : i32
      %c128_i32_85 = arith.constant 128 : i32
      %149 = arith.muli %148, %c128_i32_85 : i32
      %150 = tpu.assume_multiple %149, 128 : i32
      %151 = vector.extract_strided_slice %141 {offsets = [8, 0], sizes = [8, 128], strides = [1, 1]} : vector<64x128xf32> to vector<8x128xf32>
      %c0_86 = arith.constant 0 : index
      %152 = arith.index_cast %150 : i32 to index
      %153 = vector.load %arg6[%c0_86, %152] : memref<8x1024xf32, #tpu.memory_space<vmem>>, vector<8x128xf32>
      tpu.vector_store %arg6[%c0_86, %152], %151 {strides = array<i32>} : memref<8x1024xf32, #tpu.memory_space<vmem>>, vector<8x128xf32>,
      %c2_i32_87 = arith.constant 2 : i32
      %154 = arith.addi %133, %c2_i32_87 : i32
      %c128_i32_88 = arith.constant 128 : i32
      %155 = arith.muli %154, %c128_i32_88 : i32
      %156 = tpu.assume_multiple %155, 128 : i32
      %157 = vector.extract_strided_slice %141 {offsets = [16, 0], sizes = [8, 128], strides = [1, 1]} : vector<64x128xf32> to vector<8x128xf32>
      %c0_89 = arith.constant 0 : index
      %158 = arith.index_cast %156 : i32 to index
      %159 = vector.load %arg6[%c0_89, %158] : memref<8x1024xf32, #tpu.memory_space<vmem>>, vector<8x128xf32>
      tpu.vector_store %arg6[%c0_89, %158], %157 {strides = array<i32>} : memref<8x1024xf32, #tpu.memory_space<vmem>>, vector<8x128xf32>,
      %c3_i32_90 = arith.constant 3 : i32
      %160 = arith.addi %133, %c3_i32_90 : i32
      %c128_i32_91 = arith.constant 128 : i32
      %161 = arith.muli %160, %c128_i32_91 : i32
      %162 = tpu.assume_multiple %161, 128 : i32
      %163 = vector.extract_strided_slice %141 {offsets = [24, 0], sizes = [8, 128], strides = [1, 1]} : vector<64x128xf32> to vector<8x128xf32>
      %c0_92 = arith.constant 0 : index
      %164 = arith.index_cast %162 : i32 to index
      %165 = vector.load %arg6[%c0_92, %164] : memref<8x1024xf32, #tpu.memory_space<vmem>>, vector<8x128xf32>
      tpu.vector_store %arg6[%c0_92, %164], %163 {strides = array<i32>} : memref<8x1024xf32, #tpu.memory_space<vmem>>, vector<8x128xf32>,
      %c4_i32_93 = arith.constant 4 : i32
      %166 = arith.addi %133, %c4_i32_93 : i32
      %c128_i32_94 = arith.constant 128 : i32
      %167 = arith.muli %166, %c128_i32_94 : i32
      %168 = tpu.assume_multiple %167, 128 : i32
      %169 = vector.extract_strided_slice %141 {offsets = [32, 0], sizes = [8, 128], strides = [1, 1]} : vector<64x128xf32> to vector<8x128xf32>
      %c0_95 = arith.constant 0 : index
      %170 = arith.index_cast %168 : i32 to index
      %171 = vector.load %arg6[%c0_95, %170] : memref<8x1024xf32, #tpu.memory_space<vmem>>, vector<8x128xf32>
      tpu.vector_store %arg6[%c0_95, %170], %169 {strides = array<i32>} : memref<8x1024xf32, #tpu.memory_space<vmem>>, vector<8x128xf32>,
      %c5_i32_96 = arith.constant 5 : i32
      %172 = arith.addi %133, %c5_i32_96 : i32
      %c128_i32_97 = arith.constant 128 : i32
      %173 = arith.muli %172, %c128_i32_97 : i32
      %174 = tpu.assume_multiple %173, 128 : i32
      %175 = vector.extract_strided_slice %141 {offsets = [40, 0], sizes = [8, 128], strides = [1, 1]} : vector<64x128xf32> to vector<8x128xf32>
      %c0_98 = arith.constant 0 : index
      %176 = arith.index_cast %174 : i32 to index
      %177 = vector.load %arg6[%c0_98, %176] : memref<8x1024xf32, #tpu.memory_space<vmem>>, vector<8x128xf32>
      tpu.vector_store %arg6[%c0_98, %176], %175 {strides = array<i32>} : memref<8x1024xf32, #tpu.memory_space<vmem>>, vector<8x128xf32>,
      %c6_i32_99 = arith.constant 6 : i32
      %178 = arith.addi %133, %c6_i32_99 : i32
      %c128_i32_100 = arith.constant 128 : i32
      %179 = arith.muli %178, %c128_i32_100 : i32
      %180 = tpu.assume_multiple %179, 128 : i32
      %181 = vector.extract_strided_slice %141 {offsets = [48, 0], sizes = [8, 128], strides = [1, 1]} : vector<64x128xf32> to vector<8x128xf32>
      %c0_101 = arith.constant 0 : index
      %182 = arith.index_cast %180 : i32 to index
      %183 = vector.load %arg6[%c0_101, %182] : memref<8x1024xf32, #tpu.memory_space<vmem>>, vector<8x128xf32>
      tpu.vector_store %arg6[%c0_101, %182], %181 {strides = array<i32>} : memref<8x1024xf32, #tpu.memory_space<vmem>>, vector<8x128xf32>,
      %c7_i32_102 = arith.constant 7 : i32
      %184 = arith.addi %133, %c7_i32_102 : i32
      %c128_i32_103 = arith.constant 128 : i32
      %185 = arith.muli %184, %c128_i32_103 : i32
      %186 = tpu.assume_multiple %185, 128 : i32
      %187 = vector.extract_strided_slice %141 {offsets = [56, 0], sizes = [8, 128], strides = [1, 1]} : vector<64x128xf32> to vector<8x128xf32>
      %c0_104 = arith.constant 0 : index
      %188 = arith.index_cast %186 : i32 to index
      %189 = vector.load %arg6[%c0_104, %188] : memref<8x1024xf32, #tpu.memory_space<vmem>>, vector<8x128xf32>
      tpu.vector_store %arg6[%c0_104, %188], %187 {strides = array<i32>} : memref<8x1024xf32, #tpu.memory_space<vmem>>, vector<8x128xf32>,
      %c0_i32_105 = arith.constant 0 : i32
      %c8_i32_106 = arith.constant 8 : i32
      %190 = arith.muli %arg9, %c8_i32_106 : i32
      %191 = arith.addi %190, %c0_i32_105 : i32
      %192 = arith.index_cast %191 : i32 to index
      %c0_107 = arith.constant 0 : index
      %c0_108 = arith.constant 0 : index
      %193 = vector.load %arg1[%192, %c0_107, %c0_108] : memref<8x8x128xf32, #tpu.memory_space<vmem>>, vector<1x8x128xf32>
      %194 = vector.shape_cast %193 : vector<1x8x128xf32> to vector<8x128xf32>
      %195 = arith.truncf %arg10 : vector<8x128xf32> to vector<8x128xbf16>
      %cst_109 = arith.constant dense<0.000000e+00> : vector<8x128xf32>
      %196 = tpu.matmul %195, %0, %cst_109 {dimension_numbers = #tpu.dot_dimension_numbers<[1], [0], [0], [1], [0, 0, 1, 1], [], []>} : vector<8x128xbf16>, vector<128x128xbf16>, vector<8x128xf32> -> vector<8x128xf32>
      %197 = arith.addf %194, %196 : vector<8x128xf32>
      %198 = math.tanh %197 : vector<8x128xf32>
      %199 = arith.truncf %198 : vector<8x128xf32> to vector<8x128xbf16>
      %200 = arith.index_cast %191 : i32 to index
      %c0_110 = arith.constant 0 : index
      %c0_111 = arith.constant 0 : index
      %201 = vector.load %arg8[%200, %c0_110, %c0_111] : memref<8x8x128xbf16, #tpu.memory_space<vmem>>, vector<1x8x128xbf16>
      %202 = vector.shape_cast %201 : vector<1x8x128xbf16> to vector<8x128xbf16>
      %203 = vector.shape_cast %199 : vector<8x128xbf16> to vector<1x8x128xbf16>
      tpu.vector_store %arg8[%200, %c0_110, %c0_111], %203 {strides = array<i32>} : memref<8x8x128xbf16, #tpu.memory_space<vmem>>, vector<1x8x128xbf16>,
      %c1_i32_112 = arith.constant 1 : i32
      %c8_i32_113 = arith.constant 8 : i32
      %204 = arith.muli %arg9, %c8_i32_113 : i32
      %205 = arith.addi %204, %c1_i32_112 : i32
      %206 = arith.index_cast %205 : i32 to index
      %c0_114 = arith.constant 0 : index
      %c0_115 = arith.constant 0 : index
      %207 = vector.load %arg1[%206, %c0_114, %c0_115] : memref<8x8x128xf32, #tpu.memory_space<vmem>>, vector<1x8x128xf32>
      %208 = vector.shape_cast %207 : vector<1x8x128xf32> to vector<8x128xf32>
      %209 = arith.truncf %198 : vector<8x128xf32> to vector<8x128xbf16>
      %cst_116 = arith.constant dense<0.000000e+00> : vector<8x128xf32>
      %210 = tpu.matmul %209, %0, %cst_116 {dimension_numbers = #tpu.dot_dimension_numbers<[1], [0], [0], [1], [0, 0, 1, 1], [], []>} : vector<8x128xbf16>, vector<128x128xbf16>, vector<8x128xf32> -> vector<8x128xf32>
      %211 = arith.addf %208, %210 : vector<8x128xf32>
      %212 = math.tanh %211 : vector<8x128xf32>
      %213 = arith.truncf %212 : vector<8x128xf32> to vector<8x128xbf16>
      %214 = arith.index_cast %205 : i32 to index
      %c0_117 = arith.constant 0 : index
      %c0_118 = arith.constant 0 : index
      %215 = vector.load %arg8[%214, %c0_117, %c0_118] : memref<8x8x128xbf16, #tpu.memory_space<vmem>>, vector<1x8x128xbf16>
      %216 = vector.shape_cast %215 : vector<1x8x128xbf16> to vector<8x128xbf16>
      %217 = vector.shape_cast %213 : vector<8x128xbf16> to vector<1x8x128xbf16>
      tpu.vector_store %arg8[%214, %c0_117, %c0_118], %217 {strides = array<i32>} : memref<8x8x128xbf16, #tpu.memory_space<vmem>>, vector<1x8x128xbf16>,
      %c2_i32_119 = arith.constant 2 : i32
      %c8_i32_120 = arith.constant 8 : i32
      %218 = arith.muli %arg9, %c8_i32_120 : i32
      %219 = arith.addi %218, %c2_i32_119 : i32
      %220 = arith.index_cast %219 : i32 to index
      %c0_121 = arith.constant 0 : index
      %c0_122 = arith.constant 0 : index
      %221 = vector.load %arg1[%220, %c0_121, %c0_122] : memref<8x8x128xf32, #tpu.memory_space<vmem>>, vector<1x8x128xf32>
      %222 = vector.shape_cast %221 : vector<1x8x128xf32> to vector<8x128xf32>
      %223 = arith.truncf %212 : vector<8x128xf32> to vector<8x128xbf16>
      %cst_123 = arith.constant dense<0.000000e+00> : vector<8x128xf32>
      %224 = tpu.matmul %223, %0, %cst_123 {dimension_numbers = #tpu.dot_dimension_numbers<[1], [0], [0], [1], [0, 0, 1, 1], [], []>} : vector<8x128xbf16>, vector<128x128xbf16>, vector<8x128xf32> -> vector<8x128xf32>
      %225 = arith.addf %222, %224 : vector<8x128xf32>
      %226 = math.tanh %225 : vector<8x128xf32>
      %227 = arith.truncf %226 : vector<8x128xf32> to vector<8x128xbf16>
      %228 = arith.index_cast %219 : i32 to index
      %c0_124 = arith.constant 0 : index
      %c0_125 = arith.constant 0 : index
      %229 = vector.load %arg8[%228, %c0_124, %c0_125] : memref<8x8x128xbf16, #tpu.memory_space<vmem>>, vector<1x8x128xbf16>
      %230 = vector.shape_cast %229 : vector<1x8x128xbf16> to vector<8x128xbf16>
      %231 = vector.shape_cast %227 : vector<8x128xbf16> to vector<1x8x128xbf16>
      tpu.vector_store %arg8[%228, %c0_124, %c0_125], %231 {strides = array<i32>} : memref<8x8x128xbf16, #tpu.memory_space<vmem>>, vector<1x8x128xbf16>,
      %c3_i32_126 = arith.constant 3 : i32
      %c8_i32_127 = arith.constant 8 : i32
      %232 = arith.muli %arg9, %c8_i32_127 : i32
      %233 = arith.addi %232, %c3_i32_126 : i32
      %234 = arith.index_cast %233 : i32 to index
      %c0_128 = arith.constant 0 : index
      %c0_129 = arith.constant 0 : index
      %235 = vector.load %arg1[%234, %c0_128, %c0_129] : memref<8x8x128xf32, #tpu.memory_space<vmem>>, vector<1x8x128xf32>
      %236 = vector.shape_cast %235 : vector<1x8x128xf32> to vector<8x128xf32>
      %237 = arith.truncf %226 : vector<8x128xf32> to vector<8x128xbf16>
      %cst_130 = arith.constant dense<0.000000e+00> : vector<8x128xf32>
      %238 = tpu.matmul %237, %0, %cst_130 {dimension_numbers = #tpu.dot_dimension_numbers<[1], [0], [0], [1], [0, 0, 1, 1], [], []>} : vector<8x128xbf16>, vector<128x128xbf16>, vector<8x128xf32> -> vector<8x128xf32>
      %239 = arith.addf %236, %238 : vector<8x128xf32>
      %240 = math.tanh %239 : vector<8x128xf32>
      %241 = arith.truncf %240 : vector<8x128xf32> to vector<8x128xbf16>
      %242 = arith.index_cast %233 : i32 to index
      %c0_131 = arith.constant 0 : index
      %c0_132 = arith.constant 0 : index
      %243 = vector.load %arg8[%242, %c0_131, %c0_132] : memref<8x8x128xbf16, #tpu.memory_space<vmem>>, vector<1x8x128xbf16>
      %244 = vector.shape_cast %243 : vector<1x8x128xbf16> to vector<8x128xbf16>
      %245 = vector.shape_cast %241 : vector<8x128xbf16> to vector<1x8x128xbf16>
      tpu.vector_store %arg8[%242, %c0_131, %c0_132], %245 {strides = array<i32>} : memref<8x8x128xbf16, #tpu.memory_space<vmem>>, vector<1x8x128xbf16>,
      %c4_i32_133 = arith.constant 4 : i32
      %c8_i32_134 = arith.constant 8 : i32
      %246 = arith.muli %arg9, %c8_i32_134 : i32
      %247 = arith.addi %246, %c4_i32_133 : i32
      %248 = arith.index_cast %247 : i32 to index
      %c0_135 = arith.constant 0 : index
      %c0_136 = arith.constant 0 : index
      %249 = vector.load %arg1[%248, %c0_135, %c0_136] : memref<8x8x128xf32, #tpu.memory_space<vmem>>, vector<1x8x128xf32>
      %250 = vector.shape_cast %249 : vector<1x8x128xf32> to vector<8x128xf32>
      %251 = arith.truncf %240 : vector<8x128xf32> to vector<8x128xbf16>
      %cst_137 = arith.constant dense<0.000000e+00> : vector<8x128xf32>
      %252 = tpu.matmul %251, %0, %cst_137 {dimension_numbers = #tpu.dot_dimension_numbers<[1], [0], [0], [1], [0, 0, 1, 1], [], []>} : vector<8x128xbf16>, vector<128x128xbf16>, vector<8x128xf32> -> vector<8x128xf32>
      %253 = arith.addf %250, %252 : vector<8x128xf32>
      %254 = math.tanh %253 : vector<8x128xf32>
      %255 = arith.truncf %254 : vector<8x128xf32> to vector<8x128xbf16>
      %256 = arith.index_cast %247 : i32 to index
      %c0_138 = arith.constant 0 : index
      %c0_139 = arith.constant 0 : index
      %257 = vector.load %arg8[%256, %c0_138, %c0_139] : memref<8x8x128xbf16, #tpu.memory_space<vmem>>, vector<1x8x128xbf16>
      %258 = vector.shape_cast %257 : vector<1x8x128xbf16> to vector<8x128xbf16>
      %259 = vector.shape_cast %255 : vector<8x128xbf16> to vector<1x8x128xbf16>
      tpu.vector_store %arg8[%256, %c0_138, %c0_139], %259 {strides = array<i32>} : memref<8x8x128xbf16, #tpu.memory_space<vmem>>, vector<1x8x128xbf16>,
      %c5_i32_140 = arith.constant 5 : i32
      %c8_i32_141 = arith.constant 8 : i32
      %260 = arith.muli %arg9, %c8_i32_141 : i32
      %261 = arith.addi %260, %c5_i32_140 : i32
      %262 = arith.index_cast %261 : i32 to index
      %c0_142 = arith.constant 0 : index
      %c0_143 = arith.constant 0 : index
      %263 = vector.load %arg1[%262, %c0_142, %c0_143] : memref<8x8x128xf32, #tpu.memory_space<vmem>>, vector<1x8x128xf32>
      %264 = vector.shape_cast %263 : vector<1x8x128xf32> to vector<8x128xf32>
      %265 = arith.truncf %254 : vector<8x128xf32> to vector<8x128xbf16>
      %cst_144 = arith.constant dense<0.000000e+00> : vector<8x128xf32>
      %266 = tpu.matmul %265, %0, %cst_144 {dimension_numbers = #tpu.dot_dimension_numbers<[1], [0], [0], [1], [0, 0, 1, 1], [], []>} : vector<8x128xbf16>, vector<128x128xbf16>, vector<8x128xf32> -> vector<8x128xf32>
      %267 = arith.addf %264, %266 : vector<8x128xf32>
      %268 = math.tanh %267 : vector<8x128xf32>
      %269 = arith.truncf %268 : vector<8x128xf32> to vector<8x128xbf16>
      %270 = arith.index_cast %261 : i32 to index
      %c0_145 = arith.constant 0 : index
      %c0_146 = arith.constant 0 : index
      %271 = vector.load %arg8[%270, %c0_145, %c0_146] : memref<8x8x128xbf16, #tpu.memory_space<vmem>>, vector<1x8x128xbf16>
      %272 = vector.shape_cast %271 : vector<1x8x128xbf16> to vector<8x128xbf16>
      %273 = vector.shape_cast %269 : vector<8x128xbf16> to vector<1x8x128xbf16>
      tpu.vector_store %arg8[%270, %c0_145, %c0_146], %273 {strides = array<i32>} : memref<8x8x128xbf16, #tpu.memory_space<vmem>>, vector<1x8x128xbf16>,
      %c6_i32_147 = arith.constant 6 : i32
      %c8_i32_148 = arith.constant 8 : i32
      %274 = arith.muli %arg9, %c8_i32_148 : i32
      %275 = arith.addi %274, %c6_i32_147 : i32
      %276 = arith.index_cast %275 : i32 to index
      %c0_149 = arith.constant 0 : index
      %c0_150 = arith.constant 0 : index
      %277 = vector.load %arg1[%276, %c0_149, %c0_150] : memref<8x8x128xf32, #tpu.memory_space<vmem>>, vector<1x8x128xf32>
      %278 = vector.shape_cast %277 : vector<1x8x128xf32> to vector<8x128xf32>
      %279 = arith.truncf %268 : vector<8x128xf32> to vector<8x128xbf16>
      %cst_151 = arith.constant dense<0.000000e+00> : vector<8x128xf32>
      %280 = tpu.matmul %279, %0, %cst_151 {dimension_numbers = #tpu.dot_dimension_numbers<[1], [0], [0], [1], [0, 0, 1, 1], [], []>} : vector<8x128xbf16>, vector<128x128xbf16>, vector<8x128xf32> -> vector<8x128xf32>
      %281 = arith.addf %278, %280 : vector<8x128xf32>
      %282 = math.tanh %281 : vector<8x128xf32>
      %283 = arith.truncf %282 : vector<8x128xf32> to vector<8x128xbf16>
      %284 = arith.index_cast %275 : i32 to index
      %c0_152 = arith.constant 0 : index
      %c0_153 = arith.constant 0 : index
      %285 = vector.load %arg8[%284, %c0_152, %c0_153] : memref<8x8x128xbf16, #tpu.memory_space<vmem>>, vector<1x8x128xbf16>
      %286 = vector.shape_cast %285 : vector<1x8x128xbf16> to vector<8x128xbf16>
      %287 = vector.shape_cast %283 : vector<8x128xbf16> to vector<1x8x128xbf16>
      tpu.vector_store %arg8[%284, %c0_152, %c0_153], %287 {strides = array<i32>} : memref<8x8x128xbf16, #tpu.memory_space<vmem>>, vector<1x8x128xbf16>,
      %c7_i32_154 = arith.constant 7 : i32
      %c8_i32_155 = arith.constant 8 : i32
      %288 = arith.muli %arg9, %c8_i32_155 : i32
      %289 = arith.addi %288, %c7_i32_154 : i32
      %290 = arith.index_cast %289 : i32 to index
      %c0_156 = arith.constant 0 : index
      %c0_157 = arith.constant 0 : index
      %291 = vector.load %arg1[%290, %c0_156, %c0_157] : memref<8x8x128xf32, #tpu.memory_space<vmem>>, vector<1x8x128xf32>
      %292 = vector.shape_cast %291 : vector<1x8x128xf32> to vector<8x128xf32>
      %293 = arith.truncf %282 : vector<8x128xf32> to vector<8x128xbf16>
      %cst_158 = arith.constant dense<0.000000e+00> : vector<8x128xf32>
      %294 = tpu.matmul %293, %0, %cst_158 {dimension_numbers = #tpu.dot_dimension_numbers<[1], [0], [0], [1], [0, 0, 1, 1], [], []>} : vector<8x128xbf16>, vector<128x128xbf16>, vector<8x128xf32> -> vector<8x128xf32>
      %295 = arith.addf %292, %294 : vector<8x128xf32>
      %296 = math.tanh %295 : vector<8x128xf32>
      %297 = arith.truncf %296 : vector<8x128xf32> to vector<8x128xbf16>
      %298 = arith.index_cast %289 : i32 to index
      %c0_159 = arith.constant 0 : index
      %c0_160 = arith.constant 0 : index
      %299 = vector.load %arg8[%298, %c0_159, %c0_160] : memref<8x8x128xbf16, #tpu.memory_space<vmem>>, vector<1x8x128xbf16>
      %300 = vector.shape_cast %299 : vector<1x8x128xbf16> to vector<8x128xbf16>
      %301 = vector.shape_cast %297 : vector<8x128xbf16> to vector<1x8x128xbf16>
      tpu.vector_store %arg8[%298, %c0_159, %c0_160], %301 {strides = array<i32>} : memref<8x8x128xbf16, #tpu.memory_space<vmem>>, vector<1x8x128xbf16>,
      %c8_i32_161 = arith.constant 8 : i32
      scf.yield %296 : vector<8x128xf32>
    }
    %c0_i32_53 = arith.constant 0 : i32
    %c0_54 = arith.constant 0 : index
    %c0_55 = arith.constant 0 : index
    %108 = vector.load %arg7[%c0_54, %c0_55] : memref<8x128xf32, #tpu.memory_space<vmem>>, vector<8x128xf32>
    tpu.vector_store %arg7[%c0_54, %c0_55], %107 {strides = array<i32>} : memref<8x128xf32, #tpu.memory_space<vmem>>, vector<8x128xf32>,
    %c0_56 = arith.constant 0 : index
    %c0_57 = arith.constant 0 : index
    %c0_58 = arith.constant 0 : index
    %109 = vector.load %arg8[%c0_56, %c0_57, %c0_58] : memref<8x8x128xbf16, #tpu.memory_space<vmem>>, vector<8x8x128xbf16>
    %110 = vector.shape_cast %109 : vector<8x8x128xbf16> to vector<64x128xbf16>
    %c0_59 = arith.constant 0 : index
    %c0_60 = arith.constant 0 : index
    %111 = vector.load %arg3[%c0_59, %c0_60] : memref<128x128xbf16, #tpu.memory_space<vmem>>, vector<128x128xbf16>
    %cst_61 = arith.constant dense<0.000000e+00> : vector<64x128xf32>
    %112 = tpu.matmul %110, %111, %cst_61 {dimension_numbers = #tpu.dot_dimension_numbers<[1], [0], [0], [1], [0, 0, 1, 1], [], []>} : vector<64x128xbf16>, vector<128x128xbf16>, vector<64x128xf32> -> vector<64x128xf32>
    %c0_62 = arith.constant 0 : index
    %c0_63 = arith.constant 0 : index
    %113 = vector.load %arg4[%c0_62, %c0_63] : memref<1x128xf32, #tpu.memory_space<vmem>>, vector<1x128xf32>
    %114 = vector.broadcast %113 : vector<1x128xf32> to vector<64x128xf32>
    %115 = arith.addf %112, %114 : vector<64x128xf32>
    %116 = vector.extract_strided_slice %115 {offsets = [0, 0], sizes = [8, 128], strides = [1, 1]} : vector<64x128xf32> to vector<8x128xf32>
    %c0_64 = arith.constant 0 : index
    %c0_65 = arith.constant 0 : index
    %117 = vector.load %arg6[%c0_64, %c0_65] : memref<8x1024xf32, #tpu.memory_space<vmem>>, vector<8x128xf32>
    tpu.vector_store %arg6[%c0_64, %c0_65], %116 {strides = array<i32>} : memref<8x1024xf32, #tpu.memory_space<vmem>>, vector<8x128xf32>,
    %118 = vector.extract_strided_slice %115 {offsets = [8, 0], sizes = [8, 128], strides = [1, 1]} : vector<64x128xf32> to vector<8x128xf32>
    %c0_66 = arith.constant 0 : index
    %c128 = arith.constant 128 : index
    %119 = vector.load %arg6[%c0_66, %c128] : memref<8x1024xf32, #tpu.memory_space<vmem>>, vector<8x128xf32>
    tpu.vector_store %arg6[%c0_66, %c128], %118 {strides = array<i32>} : memref<8x1024xf32, #tpu.memory_space<vmem>>, vector<8x128xf32>,
    %120 = vector.extract_strided_slice %115 {offsets = [16, 0], sizes = [8, 128], strides = [1, 1]} : vector<64x128xf32> to vector<8x128xf32>
    %c0_67 = arith.constant 0 : index
    %c256 = arith.constant 256 : index
    %121 = vector.load %arg6[%c0_67, %c256] : memref<8x1024xf32, #tpu.memory_space<vmem>>, vector<8x128xf32>
    tpu.vector_store %arg6[%c0_67, %c256], %120 {strides = array<i32>} : memref<8x1024xf32, #tpu.memory_space<vmem>>, vector<8x128xf32>,
    %122 = vector.extract_strided_slice %115 {offsets = [24, 0], sizes = [8, 128], strides = [1, 1]} : vector<64x128xf32> to vector<8x128xf32>
    %c0_68 = arith.constant 0 : index
    %c384 = arith.constant 384 : index
    %123 = vector.load %arg6[%c0_68, %c384] : memref<8x1024xf32, #tpu.memory_space<vmem>>, vector<8x128xf32>
    tpu.vector_store %arg6[%c0_68, %c384], %122 {strides = array<i32>} : memref<8x1024xf32, #tpu.memory_space<vmem>>, vector<8x128xf32>,
    %124 = vector.extract_strided_slice %115 {offsets = [32, 0], sizes = [8, 128], strides = [1, 1]} : vector<64x128xf32> to vector<8x128xf32>
    %c0_69 = arith.constant 0 : index
    %c512 = arith.constant 512 : index
    %125 = vector.load %arg6[%c0_69, %c512] : memref<8x1024xf32, #tpu.memory_space<vmem>>, vector<8x128xf32>
    tpu.vector_store %arg6[%c0_69, %c512], %124 {strides = array<i32>} : memref<8x1024xf32, #tpu.memory_space<vmem>>, vector<8x128xf32>,
    %126 = vector.extract_strided_slice %115 {offsets = [40, 0], sizes = [8, 128], strides = [1, 1]} : vector<64x128xf32> to vector<8x128xf32>
    %c0_70 = arith.constant 0 : index
    %c640 = arith.constant 640 : index
    %127 = vector.load %arg6[%c0_70, %c640] : memref<8x1024xf32, #tpu.memory_space<vmem>>, vector<8x128xf32>
    tpu.vector_store %arg6[%c0_70, %c640], %126 {strides = array<i32>} : memref<8x1024xf32, #tpu.memory_space<vmem>>, vector<8x128xf32>,
    %128 = vector.extract_strided_slice %115 {offsets = [48, 0], sizes = [8, 128], strides = [1, 1]} : vector<64x128xf32> to vector<8x128xf32>
    %c0_71 = arith.constant 0 : index
    %c768 = arith.constant 768 : index
    %129 = vector.load %arg6[%c0_71, %c768] : memref<8x1024xf32, #tpu.memory_space<vmem>>, vector<8x128xf32>
    tpu.vector_store %arg6[%c0_71, %c768], %128 {strides = array<i32>} : memref<8x1024xf32, #tpu.memory_space<vmem>>, vector<8x128xf32>,
    %130 = vector.extract_strided_slice %115 {offsets = [56, 0], sizes = [8, 128], strides = [1, 1]} : vector<64x128xf32> to vector<8x128xf32>
    %c0_72 = arith.constant 0 : index
    %c896 = arith.constant 896 : index
    %131 = vector.load %arg6[%c0_72, %c896] : memref<8x1024xf32, #tpu.memory_space<vmem>>, vector<8x128xf32>
    tpu.vector_store %arg6[%c0_72, %c896], %130 {strides = array<i32>} : memref<8x1024xf32, #tpu.memory_space<vmem>>, vector<8x128xf32>,
    return
  }
  func.func @transform_0(%arg0: i32) -> (i32, i32, i32) {
    %c0_i32 = arith.constant 0 : i32
    %c0_i32_0 = arith.constant 0 : i32
    %c0_i32_1 = arith.constant 0 : i32
    return %c0_i32, %arg0, %c0_i32_0 : i32, i32, i32
  }
  func.func @transform_1(%arg0: i32) -> (i32, i32) {
    %c0_i32 = arith.constant 0 : i32
    %c0_i32_0 = arith.constant 0 : i32
    %c0_i32_1 = arith.constant 0 : i32
    return %c0_i32, %c0_i32_0 : i32, i32
  }
  func.func @transform_2(%arg0: i32) -> (i32, i32) {
    %c0_i32 = arith.constant 0 : i32
    %c0_i32_0 = arith.constant 0 : i32
    %c0_i32_1 = arith.constant 0 : i32
    return %c0_i32, %c0_i32_0 : i32, i32
  }
  func.func @transform_3(%arg0: i32) -> (i32, i32) {
    %c0_i32 = arith.constant 0 : i32
    %c0_i32_0 = arith.constant 0 : i32
    %c0_i32_1 = arith.constant 0 : i32
    return %c0_i32, %c0_i32_0 : i32, i32
  }
  func.func @transform_4(%arg0: i32) -> (i32, i32) {
    %c0_i32 = arith.constant 0 : i32
    %c0_i32_0 = arith.constant 0 : i32
    return %arg0, %c0_i32 : i32, i32
  }
  func.func @transform_5(%arg0: i32) -> (i32, i32) {
    %c0_i32 = arith.constant 0 : i32
    %c0_i32_0 = arith.constant 0 : i32
    return %arg0, %c0_i32 : i32, i32
  }
  func.func @transform_6(%arg0: i32) -> (i32, i32) {
    %c0_i32 = arith.constant 0 : i32
    %c0_i32_0 = arith.constant 0 : i32
    return %arg0, %c0_i32 : i32, i32
  }
}

</mosaic_0001>

<llo_original>
// kernel: char_rnn_forward.1
$region0: #{char_rnn_forward.1}
  #allocation0 [shape = 'u32[]', space=smem, size = 0x4, offset = 0x4, fixed_abs, tag = 'smem constant byte address 0x4 - core index']
  #allocation1 [shape = 'u32[72,128]{1,0:T(1,128)}', space=vmem, size = 0x9000, scoped, tag = 'internal scratch']
  #allocation2 [shape = 'bf16[8,8,128]{2,1,0:T(8,128)(2,1)}', space=vmem, size = 0x4000, scoped, tag = 'scratch operand']
  %s0 = inlined_call_operand.vmem [shape: f32[8,8,128], index: 0, kind: input, shape index: {}]
  %s1 = inlined_call_operand.vmem [shape: bf16[128,128], index: 1, kind: input, shape index: {}]
  %s2 = inlined_call_operand.vmem [shape: bf16[128,128], index: 2, kind: input, shape index: {}]
  %s3 = inlined_call_operand.vmem [shape: f32[1,128], index: 3, kind: input, shape index: {}]
  %s4 = inlined_call_operand.vmem [shape: f32[8,128], index: 4, kind: input, shape index: {}]
  %s5 = inlined_call_operand.vmem [shape: f32[8,1024], index: 5, kind: output, shape index: {0}]
  %s6 = inlined_call_operand.vmem [shape: f32[8,128], index: 6, kind: output, shape index: {1}]
  %7 = xla_tuple %s5, %s6
  %s8 = sld [smem:[#allocation0]]
  $region38: #{char_rnn_forward.1} parent=0
    _
  %s10 = ssub.s32 1, %s8
  %s11 = scalar_select 0, %s10, %s8
  // Predicated region
  $region2: #{char_rnn_forward.1} parent=0 // pred_check
    _
  $region3: #{char_rnn_forward.1} parent=0 // pred_check_branch
    %13 = sbr.rel (0) target = $region5
  $region4: #{char_rnn_forward.1} parent=0 // pred_region
    _
  $region5: #{char_rnn_forward.1} parent=0 // pred_fallthru
    _
  // Predicated region
  $region6: #{char_rnn_forward.1} parent=0 // pred_check
    _
  $region7: #{char_rnn_forward.1} parent=0 // pred_check_branch
    %15 = sbr.rel (0) target = $region9
  $region8: #{char_rnn_forward.1} parent=0 // pred_region
    _
  $region9: #{char_rnn_forward.1} parent=0 // pred_fallthru
    _
  // Predicated region
  $region10: #{char_rnn_forward.1} parent=0 // pred_check
    _
  $region11: #{char_rnn_forward.1} parent=0 // pred_check_branch
    %17 = sbr.rel (0) target = $region13
  $region12: #{char_rnn_forward.1} parent=0 // pred_region
    _
  $region13: #{char_rnn_forward.1} parent=0 // pred_fallthru
    _
  // Predicated region
  $region14: #{char_rnn_forward.1} parent=0 // pred_check
    _
  $region15: #{char_rnn_forward.1} parent=0 // pred_check_branch
    %19 = sbr.rel (0) target = $region17
  $region16: #{char_rnn_forward.1} parent=0 // pred_region
    _
  $region17: #{char_rnn_forward.1} parent=0 // pred_fallthru
    _
  // Predicated region
  $region18: #{char_rnn_forward.1} parent=0 // pred_check
    _
  $region19: #{char_rnn_forward.1} parent=0 // pred_check_branch
    %21 = sbr.rel (0) target = $region21
  $region20: #{char_rnn_forward.1} parent=0 // pred_region
    _
  $region21: #{char_rnn_forward.1} parent=0 // pred_fallthru
    _
  %v22 = vld [vmem:[%s1] sm:$0xf]
  %v23 = vld [vmem:[%s1 + $0x4] sm:$0xf]
  %v24 = vld [vmem:[%s1 + $0x8] sm:$0xf]
  %v25 = vld [vmem:[%s1 + $0xc] sm:$0xf]
  %v26 = vld [vmem:[%s1 + $0x10] sm:$0xf]
  %v27 = vld [vmem:[%s1 + $0x14] sm:$0xf]
  %v28 = vld [vmem:[%s1 + $0x18] sm:$0xf]
  %v29 = vld [vmem:[%s1 + $0x1c] sm:$0xf]
  %v30 = vld [vmem:[%s1 + $0x20] sm:$0xf]
  %v31 = vld [vmem:[%s1 + $0x24] sm:$0xf]
  %v32 = vld [vmem:[%s1 + $0x28] sm:$0xf]
  %v33 = vld [vmem:[%s1 + $0x2c] sm:$0xf]
  %v34 = vld [vmem:[%s1 + $0x30] sm:$0xf]
  %v35 = vld [vmem:[%s1 + $0x34] sm:$0xf]
  %v36 = vld [vmem:[%s1 + $0x38] sm:$0xf]
  %v37 = vld [vmem:[%s1 + $0x3c] sm:$0xf]
  %v38 = vld [vmem:[%s4] sm:$0xff]
  %v39 = vld [vmem:[%s0] sm:$0xff]
  %v40 = vpack.c.bf16 %v38, %v38
  %v57 = vunpack.c.l.b16 %v22
  %v58 = vunpack.c.l.b16 %v23
  %v59 = vunpack.c.l.b16 %v24
  %v60 = vunpack.c.l.b16 %v25
  %v61 = vunpack.c.l.b16 %v26
  %v62 = vunpack.c.l.b16 %v27
  %v63 = vunpack.c.l.b16 %v28
  %v64 = vunpack.c.l.b16 %v29
  %v65 = vunpack.c.l.b16 %v30
  %v66 = vunpack.c.l.b16 %v31
  %v67 = vunpack.c.l.b16 %v32
  %v68 = vunpack.c.l.b16 %v33
  %v69 = vunpack.c.l.b16 %v34
  %v70 = vunpack.c.l.b16 %v35
  %v71 = vunpack.c.l.b16 %v36
  %v72 = vunpack.c.l.b16 %v37
  %v73 = vpack.c.b16 %v58, %v57
  %v74 = vpack.c.b16 %v60, %v59
  %v75 = vpack.c.b16 %v62, %v61
  %v76 = vpack.c.b16 %v64, %v63
  %v77 = vpack.c.b16 %v66, %v65
  %v78 = vpack.c.b16 %v68, %v67
  %v79 = vpack.c.b16 %v70, %v69
  %v80 = vpack.c.b16 %v72, %v71
  %89 = vmatpush.bf16.msra.mxu0 %v80
  %90 = vmatpush.bf16.msra.mxu0 %v79
  %91 = vmatpush.bf16.msra.mxu0 %v78
  %92 = vmatpush.bf16.msra.mxu0 %v77
  %93 = vmatpush.bf16.msra.mxu0 %v76
  %94 = vmatpush.bf16.msra.mxu0 %v75
  %95 = vmatpush.bf16.msra.mxu0 %v74
  %96 = vmatpush.bf16.msra.mxu0 %v73
  %97 = vmatmul.bf16.gmra.mxu0 %v40
  %v98 = vpop.f32.mrf.mxu0
  %v99 = vadd.f32 0.0, %v98
  %v100 = vpop.f32.mrf.mxu0
  %101 = vdwg.mxu0
  %v102 = vadd.f32 %v39, %v99
  %v103 = vtanh.pop %v102
  %v104 = vpack.c.bf16 %v103, %v103
  %105 = vst [vmem:[#allocation2] sm:$0xf] %v104
  %s106 = scalar_lea.vmem %s0, 8
  %v107 = vld [vmem:[%s106] sm:$0xff]
  %108 = vmatpush.bf16.msra.mxu0 %v80
  %109 = vmatpush.bf16.msra.mxu0 %v79
  %110 = vmatpush.bf16.msra.mxu0 %v78
  %111 = vmatpush.bf16.msra.mxu0 %v77
  %112 = vmatpush.bf16.msra.mxu0 %v76
  %113 = vmatpush.bf16.msra.mxu0 %v75
  %114 = vmatpush.bf16.msra.mxu0 %v74
  %115 = vmatpush.bf16.msra.mxu0 %v73
  %116 = vmatmul.bf16.gmra.mxu0 %v104
  %v117 = vpop.f32.mrf.mxu0
  %v118 = vadd.f32 0.0, %v117
  %v119 = vpop.f32.mrf.mxu0
  %120 = vdwg.mxu0
  %v121 = vadd.f32 %v107, %v118
  %v122 = vtanh.pop %v121
  %v123 = vpack.c.bf16 %v122, %v122
  %s124 = scalar_lea.vmem [#allocation2], 4
  %125 = vst [vmem:[%s124] sm:$0xf] %v123
  %s126 = scalar_lea.vmem %s0, 16
  %v127 = vld [vmem:[%s126] sm:$0xff]
  %128 = vmatpush.bf16.msra.mxu0 %v80
  %129 = vmatpush.bf16.msra.mxu0 %v79
  %130 = vmatpush.bf16.msra.mxu0 %v78
  %131 = vmatpush.bf16.msra.mxu0 %v77
  %132 = vmatpush.bf16.msra.mxu0 %v76
  %133 = vmatpush.bf16.msra.mxu0 %v75
  %134 = vmatpush.bf16.msra.mxu0 %v74
  %135 = vmatpush.bf16.msra.mxu0 %v73
  %136 = vmatmul.bf16.gmra.mxu0 %v123
  %v137 = vpop.f32.mrf.mxu0
  %v138 = vadd.f32 0.0, %v137
  %v139 = vpop.f32.mrf.mxu0
  %140 = vdwg.mxu0
  %v141 = vadd.f32 %v127, %v138
  %v142 = vtanh.pop %v141
  %v143 = vpack.c.bf16 %v142, %v142
  %s144 = scalar_lea.vmem [#allocation2], 8
  %145 = vst [vmem:[%s144] sm:$0xf] %v143
  %s146 = scalar_lea.vmem %s0, 24
  %v147 = vld [vmem:[%s146] sm:$0xff]
  %148 = vmatpush.bf16.msra.mxu0 %v80
  %149 = vmatpush.bf16.msra.mxu0 %v79
  %150 = vmatpush.bf16.msra.mxu0 %v78
  %151 = vmatpush.bf16.msra.mxu0 %v77
  %152 = vmatpush.bf16.msra.mxu0 %v76
  %153 = vmatpush.bf16.msra.mxu0 %v75
  %154 = vmatpush.bf16.msra.mxu0 %v74
  %155 = vmatpush.bf16.msra.mxu0 %v73
  %156 = vmatmul.bf16.gmra.mxu0 %v143
  %v157 = vpop.f32.mrf.mxu0
  %v158 = vadd.f32 0.0, %v157
  %v159 = vpop.f32.mrf.mxu0
  %160 = vdwg.mxu0
  %v161 = vadd.f32 %v147, %v158
  %v162 = vtanh.pop %v161
  %v163 = vpack.c.bf16 %v162, %v162
  %s164 = scalar_lea.vmem [#allocation2], 12
  %165 = vst [vmem:[%s164] sm:$0xf] %v163
  %s166 = scalar_lea.vmem %s0, 32
  %v167 = vld [vmem:[%s166] sm:$0xff]
  %168 = vmatpush.bf16.msra.mxu0 %v80
  %169 = vmatpush.bf16.msra.mxu0 %v79
  %170 = vmatpush.bf16.msra.mxu0 %v78
  %171 = vmatpush.bf16.msra.mxu0 %v77
  %172 = vmatpush.bf16.msra.mxu0 %v76
  %173 = vmatpush.bf16.msra.mxu0 %v75
  %174 = vmatpush.bf16.msra.mxu0 %v74
  %175 = vmatpush.bf16.msra.mxu0 %v73
  %176 = vmatmul.bf16.gmra.mxu0 %v163
  %v177 = vpop.f32.mrf.mxu0
  %v178 = vadd.f32 0.0, %v177
  %v179 = vpop.f32.mrf.mxu0
  %180 = vdwg.mxu0
  %v181 = vadd.f32 %v167, %v178
  %v182 = vtanh.pop %v181
  %v183 = vpack.c.bf16 %v182, %v182
  %s184 = scalar_lea.vmem [#allocation2], 16
  %185 = vst [vmem:[%s184] sm:$0xf] %v183
  %s186 = scalar_lea.vmem %s0, 40
  %v187 = vld [vmem:[%s186] sm:$0xff]
  %188 = vmatpush.bf16.msra.mxu0 %v80
  %189 = vmatpush.bf16.msra.mxu0 %v79
  %190 = vmatpush.bf16.msra.mxu0 %v78
  %191 = vmatpush.bf16.msra.mxu0 %v77
  %192 = vmatpush.bf16.msra.mxu0 %v76
  %193 = vmatpush.bf16.msra.mxu0 %v75
  %194 = vmatpush.bf16.msra.mxu0 %v74
  %195 = vmatpush.bf16.msra.mxu0 %v73
  %196 = vmatmul.bf16.gmra.mxu0 %v183
  %v197 = vpop.f32.mrf.mxu0
  %v198 = vadd.f32 0.0, %v197
  %v199 = vpop.f32.mrf.mxu0
  %200 = vdwg.mxu0
  %v201 = vadd.f32 %v187, %v198
  %v202 = vtanh.pop %v201
  %v203 = vpack.c.bf16 %v202, %v202
  %s204 = scalar_lea.vmem [#allocation2], 20
  %205 = vst [vmem:[%s204] sm:$0xf] %v203
  %s206 = scalar_lea.vmem %s0, 48
  %v207 = vld [vmem:[%s206] sm:$0xff]
  %208 = vmatpush.bf16.msra.mxu0 %v80
  %209 = vmatpush.bf16.msra.mxu0 %v79
  %210 = vmatpush.bf16.msra.mxu0 %v78
  %211 = vmatpush.bf16.msra.mxu0 %v77
  %212 = vmatpush.bf16.msra.mxu0 %v76
  %213 = vmatpush.bf16.msra.mxu0 %v75
  %214 = vmatpush.bf16.msra.mxu0 %v74
  %215 = vmatpush.bf16.msra.mxu0 %v73
  %216 = vmatmul.bf16.gmra.mxu0 %v203
  %v217 = vpop.f32.mrf.mxu0
  %v218 = vadd.f32 0.0, %v217
  %v219 = vpop.f32.mrf.mxu0
  %220 = vdwg.mxu0
  %v221 = vadd.f32 %v207, %v218
  %v222 = vtanh.pop %v221
  %v223 = vpack.c.bf16 %v222, %v222
  %s224 = scalar_lea.vmem [#allocation2], 24
  %225 = vst [vmem:[%s224] sm:$0xf] %v223
  %s226 = scalar_lea.vmem %s0, 56
  %v227 = vld [vmem:[%s226] sm:$0xff]
  %228 = vmatpush.bf16.msra.mxu0 %v80
  %229 = vmatpush.bf16.msra.mxu0 %v79
  %230 = vmatpush.bf16.msra.mxu0 %v78
  %231 = vmatpush.bf16.msra.mxu0 %v77
  %232 = vmatpush.bf16.msra.mxu0 %v76
  %233 = vmatpush.bf16.msra.mxu0 %v75
  %234 = vmatpush.bf16.msra.mxu0 %v74
  %235 = vmatpush.bf16.msra.mxu0 %v73
  %236 = vmatmul.bf16.gmra.mxu0 %v223
  %v237 = vpop.f32.mrf.mxu0
  %v238 = vadd.f32 0.0, %v237
  %v239 = vpop.f32.mrf.mxu0
  %240 = vdwg.mxu0
  %v241 = vadd.f32 %v227, %v238
  %v242 = vtanh.pop %v241
  %v243 = vpack.c.bf16 %v242, %v242
  %s244 = scalar_lea.vmem [#allocation2], 28
  %245 = vst [vmem:[%s244] sm:$0xf] %v243
  %246 = vst [vmem:[%s6] sm:$0xff] %v242
  %v247 = vld [vmem:[#allocation2] sm:$0xf]
  %v248 = vld [vmem:[#allocation2 + $0x4] sm:$0xf]
  %v249 = vld [vmem:[#allocation2 + $0x8] sm:$0xf]
  %v250 = vld [vmem:[#allocation2 + $0xc] sm:$0xf]
  %v251 = vld [vmem:[#allocation2 + $0x10] sm:$0xf]
  %v252 = vld [vmem:[#allocation2 + $0x14] sm:$0xf]
  %v253 = vld [vmem:[#allocation2 + $0x18] sm:$0xf]
  %v254 = vld [vmem:[#allocation2 + $0x1c] sm:$0xf]
  %v255 = vld [vmem:[%s2] sm:$0xf]
  %v256 = vld [vmem:[%s2 + $0x4] sm:$0xf]
  %v257 = vld [vmem:[%s2 + $0x8] sm:$0xf]
  %v258 = vld [vmem:[%s2 + $0xc] sm:$0xf]
  %v259 = vld [vmem:[%s2 + $0x10] sm:$0xf]
  %v260 = vld [vmem:[%s2 + $0x14] sm:$0xf]
  %v261 = vld [vmem:[%s2 + $0x18] sm:$0xf]
  %v262 = vld [vmem:[%s2 + $0x1c] sm:$0xf]
  %v263 = vld [vmem:[%s2 + $0x20] sm:$0xf]
  %v264 = vld [vmem:[%s2 + $0x24] sm:$0xf]
  %v265 = vld [vmem:[%s2 + $0x28] sm:$0xf]
  %v266 = vld [vmem:[%s2 + $0x2c] sm:$0xf]
  %v267 = vld [vmem:[%s2 + $0x30] sm:$0xf]
  %v268 = vld [vmem:[%s2 + $0x34] sm:$0xf]
  %v269 = vld [vmem:[%s2 + $0x38] sm:$0xf]
  %v270 = vld [vmem:[%s2 + $0x3c] sm:$0xf]
  %v271 = vld [vmem:[%s3] sm:$0x1]
  %v273 = vperm.slane %v271, 0
  %v283 = vunpack.c.l.b16 %v247
  %v284 = vunpack.c.l.b16 %v248
  %v285 = vunpack.c.l.b16 %v249
  %v286 = vunpack.c.l.b16 %v250
  %v287 = vunpack.c.l.b16 %v251
  %v288 = vunpack.c.l.b16 %v252
  %v289 = vunpack.c.l.b16 %v253
  %v290 = vunpack.c.l.b16 %v254
  %v291 = vpack.c.b16 %v284, %v283
  %v292 = vpack.c.b16 %v286, %v285
  %v293 = vpack.c.b16 %v288, %v287
  %v294 = vpack.c.b16 %v290, %v289
  %v315 = vunpack.c.l.b16 %v255
  %v316 = vunpack.c.l.b16 %v256
  %v317 = vunpack.c.l.b16 %v257
  %v318 = vunpack.c.l.b16 %v258
  %v319 = vunpack.c.l.b16 %v259
  %v320 = vunpack.c.l.b16 %v260
  %v321 = vunpack.c.l.b16 %v261
  %v322 = vunpack.c.l.b16 %v262
  %v323 = vunpack.c.l.b16 %v263
  %v324 = vunpack.c.l.b16 %v264
  %v325 = vunpack.c.l.b16 %v265
  %v326 = vunpack.c.l.b16 %v266
  %v327 = vunpack.c.l.b16 %v267
  %v328 = vunpack.c.l.b16 %v268
  %v329 = vunpack.c.l.b16 %v269
  %v330 = vunpack.c.l.b16 %v270
  %v331 = vpack.c.b16 %v316, %v315
  %v332 = vpack.c.b16 %v318, %v317
  %v333 = vpack.c.b16 %v320, %v319
  %v334 = vpack.c.b16 %v322, %v321
  %v335 = vpack.c.b16 %v324, %v323
  %v336 = vpack.c.b16 %v326, %v325
  %v337 = vpack.c.b16 %v328, %v327
  %v338 = vpack.c.b16 %v330, %v329
  %347 = vmatpush.bf16.msra.mxu0 %v338
  %348 = vmatpush.bf16.msra.mxu0 %v337
  %349 = vmatpush.bf16.msra.mxu0 %v336
  %350 = vmatpush.bf16.msra.mxu0 %v335
  %351 = vmatpush.bf16.msra.mxu0 %v334
  %352 = vmatpush.bf16.msra.mxu0 %v333
  %353 = vmatpush.bf16.msra.mxu0 %v332
  %354 = vmatpush.bf16.msra.mxu0 %v331
  %355 = vmatmul.bf16.gmra.mxu0 %v291
  %v356 = vpop.f32.mrf.mxu0
  %v357 = vadd.f32 %v273, %v356
  %v358 = vpop.f32.mrf.mxu0
  %v359 = vadd.f32 %v273, %v358
  %360 = vmatmul.bf16.gmra.mxu0 %v292
  %v361 = vpop.f32.mrf.mxu0
  %v362 = vadd.f32 %v273, %v361
  %v363 = vpop.f32.mrf.mxu0
  %v364 = vadd.f32 %v273, %v363
  %365 = vmatmul.bf16.gmra.mxu0 %v293
  %v366 = vpop.f32.mrf.mxu0
  %v367 = vadd.f32 %v273, %v366
  %v368 = vpop.f32.mrf.mxu0
  %v369 = vadd.f32 %v273, %v368
  %370 = vmatmul.bf16.gmra.mxu0 %v294
  %v371 = vpop.f32.mrf.mxu0
  %v372 = vadd.f32 %v273, %v371
  %v373 = vpop.f32.mrf.mxu0
  %v374 = vadd.f32 %v273, %v373
  %375 = vdwg.mxu0
  %376 = vst [vmem:[%s5] sm:$0xff] %v357
  %377 = vst [vmem:[%s5 + $0x8] sm:$0xff] %v359
  %378 = vst [vmem:[%s5 + $0x10] sm:$0xff] %v362
  %379 = vst [vmem:[%s5 + $0x18] sm:$0xff] %v364
  %380 = vst [vmem:[%s5 + $0x20] sm:$0xff] %v367
  %381 = vst [vmem:[%s5 + $0x28] sm:$0xff] %v369
  %382 = vst [vmem:[%s5 + $0x30] sm:$0xff] %v372
  %383 = vst [vmem:[%s5 + $0x38] sm:$0xff] %v374
  // Predicated region
  $region22: #{char_rnn_forward.1} parent=0 // pred_check
    _
  $region23: #{char_rnn_forward.1} parent=0 // pred_check_branch
    %385 = sbr.rel (0) target = $region25
  $region24: #{char_rnn_forward.1} parent=0 // pred_region
    _
  $region25: #{char_rnn_forward.1} parent=0 // pred_fallthru
    _
  // Predicated region
  $region26: #{char_rnn_forward.1} parent=0 // pred_check
    _
  $region27: #{char_rnn_forward.1} parent=0 // pred_check_branch
    %387 = sbr.rel (0) target = $region29
  $region28: #{char_rnn_forward.1} parent=0 // pred_region
    _
  $region29: #{char_rnn_forward.1} parent=0 // pred_fallthru
    _
  // Predicated region
  $region30: #{char_rnn_forward.1} parent=0 // pred_check
    _
  $region31: #{char_rnn_forward.1} parent=0 // pred_check_branch
    %389 = sbr.rel (0) target = $region33
  $region32: #{char_rnn_forward.1} parent=0 // pred_region
    _
  $region33: #{char_rnn_forward.1} parent=0 // pred_fallthru
    _
  // Predicated region
  $region34: #{char_rnn_forward.1} parent=0 // pred_check
    _
  $region35: #{char_rnn_forward.1} parent=0 // pred_check_branch
    %391 = sbr.rel (0) target = $region37
  $region36: #{char_rnn_forward.1} parent=0 // pred_region
    _
  $region37: #{char_rnn_forward.1} parent=0 // pred_fallthru
    _

</llo_original>
